<compile_context>
chip_gen: v6e
topology: v6e:2x2x1
jax: 0.10.0
libtpu: 0.0.40
codegen_flags: <defaults>
</compile_context>

<pallas_src>
import functools

import jax
import jax.numpy as jnp
import numpy as np
from jax.experimental import pallas as pl
from jax.experimental.pallas import tpu as pltpu

LANES = 128          # vreg lane width
SUB_CHUNK = 8        # spatial sublanes per inner-loop step (8 * 128 columns)
_K_LIVE_TEMPS = 6    # budgeted live f32 (C, SUB_CHUNK, 128) temporaries / chunk


def _round_up(v: int, m: int) -> int:
    return (v + m - 1) // m * m


def _default_vmem_budget() -> int:
    """VMEM bytes the kernel plans around (blocks + in-kernel temporaries)."""
    budget = 40 << 20                       # safe on v7x's 64 MiB physical VMEM
    try:
        cap = int(pltpu.get_tpu_info().vmem_capacity_bytes)
        if cap >= (100 << 20):              # v5e / v6e: 128 MiB physical VMEM
            budget = 80 << 20
        elif cap < (64 << 20):
            budget = max(16 << 20, (cap * 5) // 8)
    except Exception:
        pass                                # API drift / interpret mode: keep default
    return budget


def _pick_tiling(s: int, target_cols: int):
    """Choose (s_padded, tile_cols, chunk_sublanes).

    Guarantees tile_cols | s_padded, tile_cols % 128 == 0 and
    (tile_cols // 128) % chunk_sublanes == 0, so the kernel never sees a
    partial Pallas block and the inner chunk loop is exact.
    """
    s128 = _round_up(s, LANES)
    if s128 // LANES <= SUB_CHUNK:                      # tiny spatial extent
        return s128, s128, max(1, s128 // LANES)
    unit = SUB_CHUNK * LANES                            # 1024 columns
    s_pad = _round_up(s, unit)
    target = max(unit, (min(int(target_cols), s_pad) // unit) * unit)
    if target >= s_pad:                                 # whole image in one tile
        return s_pad, s_pad, SUB_CHUNK
    best = 0
    for cand in range(target, unit - 1, -unit):         # largest divisor <= target
        if s_pad % cand == 0:
            best = cand
            break
    if best >= max(unit, target // 4):
        return s_pad, best, SUB_CHUNK
    s_pad = _round_up(s, target)                        # no decent divisor: pad more
    return s_pad, target, SUB_CHUNK


def _acls_kernel(x_ref, t_ref, ce_ref, cnt_ref, pos_ref, neg_ref, *,
                 margin, ignore_index, valid_cols, tile_cols, chunk_sub,
                 n_chunks, n_s_tiles, shards, shard_tiles, mask_tail,
                 guard_ghost):
    """One grid step: accumulate the 4 partial sums over one spatial tile.

    x_ref : (1, C, SUB_TILE, 128)  logits block (input dtype; cast per chunk)
    t_ref : (1, 1, SUB_TILE, 128)  int32 targets block
    *_ref : (1, 1, 1) f32 partial sums, resident across the tile axis
    """
    j = pl.program_id(1)

    @pl.when(j == 0)
    def _init():
        ce_ref[...] = jnp.zeros_like(ce_ref)
        cnt_ref[...] = jnp.zeros_like(cnt_ref)
        pos_ref[...] = jnp.zeros_like(pos_ref)
        neg_ref[...] = jnp.zeros_like(neg_ref)

    if shards > 1:
        i = pl.program_id(0)
        global_tile = (i % shards) * shard_tiles + j
    else:
        global_tile = j

    c = x_ref.shape[1]

    def _accumulate():
        cls_idx = jax.lax.broadcasted_iota(jnp.int32, (c, chunk_sub, LANES), 0)
        if mask_tail:
            sub = jax.lax.broadcasted_iota(jnp.int32, (1, chunk_sub, LANES), 1)
            lane = jax.lax.broadcasted_iota(jnp.int32, (1, chunk_sub, LANES), 2)
            pos_in_chunk = sub * LANES + lane           # hoisted out of the loop

        def _chunk(k):
            off = k * chunk_sub
            if not isinstance(off, int):
                off = pl.multiple_of(off, chunk_sub)
            x = x_ref[0, :, pl.ds(off, chunk_sub), :].astype(jnp.float32)
            t = t_ref[0, :, pl.ds(off, chunk_sub), :]            # (1, cs, 128)

            # Class-axis reductions: axis 0 is a non-tiled major axis, so these
            # lower to per-vreg VPU max/add chains (no XLU, no MXU needed).
            col_max = jnp.max(x, axis=0, keepdims=True)          # (1, cs, 128)
            exp_sum = jnp.sum(jnp.exp(x - col_max), axis=0, keepdims=True)
            lse = jnp.log(exp_sum) + col_max

            logit_t = jnp.sum(jnp.where(cls_idx == t, x, 0.0),
                              axis=0, keepdims=True)
            valid = (t != ignore_index).astype(jnp.float32)
            ce = (lse - logit_t) * valid

            is_max = x == col_max
            n_ties = jnp.sum(is_max.astype(jnp.float32), axis=0, keepdims=True)
            pdm = jnp.maximum(col_max - margin, 0.0)
            pos = (pdm * pdm) * n_ties

            ndm = jnp.maximum((col_max - x) - margin, 0.0)
            neg_el = ndm * ndm
            if margin < 0.0:
                # For margin >= 0 the argmax entries already clamp to zero.
                neg_el = jnp.where(is_max, 0.0, neg_el)
            neg = jnp.sum(neg_el, axis=0, keepdims=True)

            if mask_tail:
                # Only the positive term can pick up the zero-padded tail
                # columns (and only when margin < 0); everything else is inert.
                col = global_tile * tile_cols + off * LANES + pos_in_chunk
                pos = pos * (col < valid_cols).astype(jnp.float32)

            ce_ref[...] += jnp.sum(ce)
            cnt_ref[...] += jnp.sum(valid)
            pos_ref[...] += jnp.sum(pos)
            neg_ref[...] += jnp.sum(neg)

        if n_chunks == 1:
            _chunk(0)
        else:
            pl.loop(0, n_chunks)(_chunk)

    if guard_ghost:
        pl.when(global_tile < n_s_tiles)(_accumulate)
    else:
        _accumulate()


def acls_loss(inputs, targets, *, pos_lambda=1.0, neg_lambda=0.1, alpha=0.1,
              margin=10.0, ignore_index=-100, tile_cols=None,
              vmem_budget_bytes=None):
    """ACLS.forward. inputs: (N, C) or (N, C, H, W); targets: (N,) or (N, H, W)."""
    if inputs.ndim > 2:
        n, c = inputs.shape[0], inputs.shape[1]
        # NCHW -> (N, C, H*W): contiguous reshape only — no transpose, no extra
        # HBM pass.  The loss is invariant to the sample relabeling.
        x = inputs.reshape(n, c, -1)
        t = targets.reshape(n, 1, -1)
    else:
        n, c = inputs.shape
        # TODO(synk): the rare 2-D path materializes one (N, C) -> (C, N)
        # transpose so classes land on the reduction-friendly major axis.
        x = inputs.T.reshape(1, c, n)
        t = targets.reshape(1, 1, n)

    b, _, s = x.shape
    t = t.astype(jnp.int32)
    rows = b * s                                   # torch batch_size after flatten

    # ---- choose the spatial tiling from the input dtype & per-chip VMEM budget
    itemsize = int(np.dtype(inputs.dtype).itemsize)
    budget = _default_vmem_budget() if vmem_budget_bytes is None \
        else int(vmem_budget_bytes)
    per_col = 2 * c * itemsize + 2 * 4             # double-buffered logits+targets
    reserve = _K_LIVE_TEMPS * c * SUB_CHUNK * LANES * 4 + (2 << 20)
    # TODO(synk): assumes one (C, 8, 128) chunk's class axis fits in VMEM (true
    # for the module's num_classes=200); vocabulary-sized C would need a
    # class-split grid axis.
    target_cols = max(SUB_CHUNK * LANES, (budget - reserve) // per_col)
    if tile_cols is not None:
        target_cols = int(tile_cols)
    s_pad, tile_c, chunk_sub = _pick_tiling(int(s), int(target_cols))

    if s_pad != s:
        # TODO(synk): this pad is one extra HBM copy of the logits; it only
        # triggers when H*W has no convenient 128-multiple tile divisor.
        x = jnp.pad(x, ((0, 0), (0, 0), (0, s_pad - s)))
        t = jnp.pad(t, ((0, 0), (0, 0), (0, s_pad - s)),
                    constant_values=ignore_index)

    sub_total = s_pad // LANES
    sub_tile = tile_c // LANES
    n_s_tiles = s_pad // tile_c
    n_chunks = sub_tile // chunk_sub

    # (b, c, s_pad) -> (b, c, s_pad//128, 128): free reshape; spatial becomes
    # (sublane, lane) and the class axis is a major (non-tiled) axis.
    x = x.reshape(b, c, sub_total, LANES)
    t = t.reshape(b, 1, sub_total, LANES)

    # With a single image, split the tiles into two parallel super-shards so
    # both v7x TensorCores get work; harmless on single-TC chips.
    shards = 2 if (b == 1 and n_s_tiles >= 2) else 1
    shard_tiles = pl.cdiv(n_s_tiles, shards)
    guard_ghost = shards > 1 and (n_s_tiles % shards != 0)
    mask_tail = (s_pad != s) and (margin < 0.0)

    kernel = functools.partial(
        _acls_kernel, margin=float(margin), ignore_index=int(ignore_index),
        valid_cols=int(s), tile_cols=int(tile_c), chunk_sub=int(chunk_sub),
        n_chunks=int(n_chunks), n_s_tiles=int(n_s_tiles), shards=int(shards),
        shard_tiles=int(shard_tiles), mask_tail=bool(mask_tail),
        guard_ghost=bool(guard_ghost))

    if shards == 1:
        in_map = lambda i, j: (i, 0, j, 0)
    else:
        def in_map(i, j):
            gt = jnp.minimum((i % shards) * shard_tiles + j, n_s_tiles - 1)
            return (i // shards, 0, gt, 0)
    out_map = lambda i, j: (i, 0, 0)

    part = jax.ShapeDtypeStruct((b * shards, 1, 1), jnp.float32)
    out_spec = pl.BlockSpec((1, 1, 1), out_map)
    vmem_limit = int(min(budget + (8 << 20), 112 << 20))

    ce_p, cnt_p, pos_p, neg_p = pl.pallas_call(
        kernel,
        out_shape=(part, part, part, part),
        grid_spec=pltpu.PrefetchScalarGridSpec(
            num_scalar_prefetch=0,
            grid=(b * shards, shard_tiles),
            in_specs=[
                pl.BlockSpec((1, c, sub_tile, LANES), in_map),
                pl.BlockSpec((1, 1, sub_tile, LANES), in_map),
            ],
            out_specs=[out_spec, out_spec, out_spec, out_spec],
        ),
        compiler_params=pltpu.CompilerParams(
            dimension_semantics=("parallel", "arbitrary"),
            vmem_limit_bytes=vmem_limit),
    )(x, t)

    ce_sum = jnp.sum(ce_p)
    cnt = jnp.sum(cnt_p)
    pos_sum = jnp.sum(pos_p)
    neg_sum = jnp.sum(neg_p)

    loss_ce = ce_sum / cnt                         # mean over non-ignored targets
    num_pos = rows * 1.0
    num_neg = rows * (c - 1.0)
    reg = pos_lambda * (pos_sum / num_pos) + neg_lambda * (neg_sum / num_neg)
    return loss_ce + alpha * reg


def _acls_loss_ref(inputs, targets, *, pos_lambda=1.0, neg_lambda=0.1, alpha=0.1,
                   margin=10.0, ignore_index=-100):
    """Pure-JAX reference mirroring the PyTorch module."""
    if inputs.ndim > 2:
        nb, c = inputs.shape[0], inputs.shape[1]
        x = inputs.reshape(nb, c, -1).transpose(0, 2, 1).reshape(-1, c)
        t = targets.reshape(-1)
    else:
        x, t = inputs, targets
    x = x.astype(jnp.float32)
    t = t.astype(jnp.int32)
    n_rows, c = x.shape

    lse = jax.scipy.special.logsumexp(x, axis=1)
    t_safe = jnp.where(t == ignore_index, 0, t)
    logit_t = jnp.take_along_axis(x, t_safe[:, None], axis=1)[:, 0]
    valid = (t != ignore_index).astype(jnp.float32)
    loss_ce = jnp.sum((lse - logit_t) * valid) / jnp.sum(valid)

    row_max = jnp.max(x, axis=1, keepdims=True)
    indicator = (row_max == x).astype(jnp.float32)
    neg_dist = row_max - x
    pos_dist_margin = jnp.maximum(row_max - margin, 0.0)
    neg_dist_margin = jnp.maximum(neg_dist - margin, 0.0)
    pos = indicator * pos_dist_margin ** 2
    neg = (1.0 - indicator) * neg_dist_margin ** 2
    reg = pos_lambda * (pos.sum() / (n_rows * 1.0)) + \
        neg_lambda * (neg.sum() / (n_rows * (c - 1.0)))
    return loss_ce + alpha * reg


if __name__ == "__main__":
    key = jax.random.PRNGKey(0)

    def _check(x, tgt, name, **kw):
        got = jax.block_until_ready(acls_loss(x, tgt, **kw))
        ref_kw = {k: v for k, v in kw.items()
                  if k in ("pos_lambda", "neg_lambda", "alpha", "margin",
                           "ignore_index")}
        want = _acls_loss_ref(x, tgt, **ref_kw)
        np.testing.assert_allclose(np.asarray(got), np.asarray(want),
                                   rtol=1e-4, atol=1e-4, err_msg=name)

    # 1) Small NCHW case (typical segmentation-style use of the module).
    k1, k2 = jax.random.split(key)
    B, C, H, W = 2, 8, 16, 16
    x1 = 8.0 * jax.random.normal(k1, (B, C, H, W), dtype=jnp.float32)
    t1 = jax.random.randint(k2, (B, H, W), 0, C, dtype=jnp.int32)
    t1 = t1.at[0, 0, :3].set(-100)               # a few ignored pixels
    _check(x1, t1, "basic")

    # 2) B=1, larger C: exercises the 2-way parallel shard split and the
    #    multi-chunk inner loop.
    k3, k4 = jax.random.split(k1)
    x2 = 8.0 * jax.random.normal(k3, (1, 128, 64, 64), dtype=jnp.float32)
    t2 = jax.random.randint(k4, (1, 64, 64), 0, 128, dtype=jnp.int32)
    _check(x2, t2, "b1_shards", tile_cols=2048)

    # 3) Ragged spatial extent + negative margin: exercises padding, the ghost
    #    tile guard, the tail mask and the tie-mask path.
    k5, k6 = jax.random.split(k3)
    x3 = 2.0 * jax.random.normal(k5, (1, 16, 50, 50), dtype=jnp.float32)
    t3 = jax.random.randint(k6, (1, 50, 50), 0, 16, dtype=jnp.int32)
    _check(x3, t3, "ragged_neg_margin", tile_cols=1024, margin=-0.5)

    # 4) Plain 2-D classification path.
    k7, k8 = jax.random.split(k5)
    x4 = 4.0 * jax.random.normal(k7, (64, 16), dtype=jnp.float32)
    t4 = jax.random.randint(k8, (64,), 0, 16, dtype=jnp.int32)
    _check(x4, t4, "2d")

    print("KERNEL_OK")
</pallas_src>

<mosaic_0001>
module attributes {stable_mosaic.version = 11 : i64} {
  func.func @_acls_kernel(%arg0: i32, %arg1: i32, %arg2: memref<1x8x2x128xf32, #tpu.memory_space<vmem>>, %arg3: memref<1x1x2x128xi32, #tpu.memory_space<vmem>>, %arg4: memref<1x1x1xf32, #tpu.memory_space<vmem>>, %arg5: memref<1x1x1xf32, #tpu.memory_space<vmem>>, %arg6: memref<1x1x1xf32, #tpu.memory_space<vmem>>, %arg7: memref<1x1x1xf32, #tpu.memory_space<vmem>>) attributes {dimension_semantics = [#tpu.dimension_semantics<parallel>, #tpu.dimension_semantics<arbitrary>], iteration_bounds = array<i64: 2, 1>, scalar_prefetch = 0 : i64, scratch_operands = 0 : i64, tpu.core_type = #tpu.core_type<tc>, window_params = [{transform_indices = @transform_0, window_bounds = array<i64: 1, 8, 2, 128>}, {transform_indices = @transform_1, window_bounds = array<i64: 1, 1, 2, 128>}, {transform_indices = @transform_2, window_bounds = array<i64: 1, 1, 1>}, {transform_indices = @transform_3, window_bounds = array<i64: 1, 1, 1>}, {transform_indices = @transform_4, window_bounds = array<i64: 1, 1, 1>}, {transform_indices = @transform_5, window_bounds = array<i64: 1, 1, 1>}]} {
    %c0_i32 = arith.constant 0 : i32
    %0 = arith.cmpi eq, %arg1, %c0_i32 : i32
    %1 = arith.extui %0 : i1 to i32
    %c0_i32_0 = arith.constant 0 : i32
    %2 = arith.cmpi ne, %1, %c0_i32_0 : i32
    scf.if %2 {
      %cst_45 = arith.constant 0.000000e+00 : f32
      %82 = vector.broadcast %cst_45 : f32 to vector<1x1x1xf32>
      %c0_46 = arith.constant 0 : index
      %c0_47 = arith.constant 0 : index
      %c0_48 = arith.constant 0 : index
      %83 = vector.load %arg4[%c0_46, %c0_47, %c0_48] : memref<1x1x1xf32, #tpu.memory_space<vmem>>, vector<1x1x1xf32>
      tpu.vector_store %arg4[%c0_46, %c0_47, %c0_48], %82 {strides = array<i32>} : memref<1x1x1xf32, #tpu.memory_space<vmem>>, vector<1x1x1xf32>,
      %cst_49 = arith.constant 0.000000e+00 : f32
      %84 = vector.broadcast %cst_49 : f32 to vector<1x1x1xf32>
      %c0_50 = arith.constant 0 : index
      %c0_51 = arith.constant 0 : index
      %c0_52 = arith.constant 0 : index
      %85 = vector.load %arg5[%c0_50, %c0_51, %c0_52] : memref<1x1x1xf32, #tpu.memory_space<vmem>>, vector<1x1x1xf32>
      tpu.vector_store %arg5[%c0_50, %c0_51, %c0_52], %84 {strides = array<i32>} : memref<1x1x1xf32, #tpu.memory_space<vmem>>, vector<1x1x1xf32>,
      %cst_53 = arith.constant 0.000000e+00 : f32
      %86 = vector.broadcast %cst_53 : f32 to vector<1x1x1xf32>
      %c0_54 = arith.constant 0 : index
      %c0_55 = arith.constant 0 : index
      %c0_56 = arith.constant 0 : index
      %87 = vector.load %arg6[%c0_54, %c0_55, %c0_56] : memref<1x1x1xf32, #tpu.memory_space<vmem>>, vector<1x1x1xf32>
      tpu.vector_store %arg6[%c0_54, %c0_55, %c0_56], %86 {strides = array<i32>} : memref<1x1x1xf32, #tpu.memory_space<vmem>>, vector<1x1x1xf32>,
      %cst_57 = arith.constant 0.000000e+00 : f32
      %88 = vector.broadcast %cst_57 : f32 to vector<1x1x1xf32>
      %c0_58 = arith.constant 0 : index
      %c0_59 = arith.constant 0 : index
      %c0_60 = arith.constant 0 : index
      %89 = vector.load %arg7[%c0_58, %c0_59, %c0_60] : memref<1x1x1xf32, #tpu.memory_space<vmem>>, vector<1x1x1xf32>
      tpu.vector_store %arg7[%c0_58, %c0_59, %c0_60], %88 {strides = array<i32>} : memref<1x1x1xf32, #tpu.memory_space<vmem>>, vector<1x1x1xf32>,
    } else {
    }
    %3 = tpu.iota {dimensions = array<i32: 0>} : vector<8x2x128xi32>
    %c0 = arith.constant 0 : index
    %c0_1 = arith.constant 0 : index
    %c0_2 = arith.constant 0 : index
    %c0_3 = arith.constant 0 : index
    %4 = vector.load %arg2[%c0, %c0_1, %c0_2, %c0_3] : memref<1x8x2x128xf32, #tpu.memory_space<vmem>>, vector<1x8x2x128xf32>
    %5 = vector.shape_cast %4 : vector<1x8x2x128xf32> to vector<8x2x128xf32>
    %c0_4 = arith.constant 0 : index
    %c0_5 = arith.constant 0 : index
    %c0_6 = arith.constant 0 : index
    %c0_7 = arith.constant 0 : index
    %6 = vector.load %arg3[%c0_4, %c0_5, %c0_6, %c0_7] : memref<1x1x2x128xi32, #tpu.memory_space<vmem>>, vector<1x1x2x128xi32>
    %7 = vector.shape_cast %6 : vector<1x1x2x128xi32> to vector<1x2x128xi32>
    %cst = arith.constant dense<0xFF800000> : vector<2x128xf32>
    %8 = vector.multi_reduction <maximumf>, %5, %cst [0] : vector<8x2x128xf32> to vector<2x128xf32>
    %9 = vector.shape_cast %8 : vector<2x128xf32> to vector<1x2x128xf32>
    %10 = vector.broadcast %9 : vector<1x2x128xf32> to vector<8x2x128xf32>
    %11 = arith.subf %5, %10 : vector<8x2x128xf32>
    %12 = math.exp %11 : vector<8x2x128xf32>
    %cst_8 = arith.constant dense<0.000000e+00> : vector<2x128xf32>
    %13 = vector.multi_reduction <add>, %12, %cst_8 [0] : vector<8x2x128xf32> to vector<2x128xf32>
    %14 = vector.shape_cast %13 : vector<2x128xf32> to vector<1x2x128xf32>
    %15 = math.log %14 : vector<1x2x128xf32>
    %16 = arith.addf %15, %9 : vector<1x2x128xf32>
    %17 = vector.broadcast %7 : vector<1x2x128xi32> to vector<8x2x128xi32>
    %18 = arith.cmpi eq, %3, %17 : vector<8x2x128xi32>
    %cst_9 = arith.constant 0.000000e+00 : f32
    %19 = vector.broadcast %cst_9 : f32 to vector<8x2x128xf32>
    %20 = arith.select %18, %5, %19 : vector<8x2x128xi1>, vector<8x2x128xf32>
    %cst_10 = arith.constant dense<0.000000e+00> : vector<2x128xf32>
    %21 = vector.multi_reduction <add>, %20, %cst_10 [0] : vector<8x2x128xf32> to vector<2x128xf32>
    %22 = vector.shape_cast %21 : vector<2x128xf32> to vector<1x2x128xf32>
    %c-100_i32 = arith.constant -100 : i32
    %23 = vector.broadcast %c-100_i32 : i32 to vector<1x2x128xi32>
    %24 = arith.cmpi ne, %7, %23 : vector<1x2x128xi32>
    %25 = arith.extui %24 : vector<1x2x128xi1> to vector<1x2x128xi32>
    %26 = arith.sitofp %25 : vector<1x2x128xi32> to vector<1x2x128xf32>
    %27 = arith.subf %16, %22 : vector<1x2x128xf32>
    %28 = arith.mulf %27, %26 : vector<1x2x128xf32>
    %29 = vector.broadcast %9 : vector<1x2x128xf32> to vector<8x2x128xf32>
    %30 = arith.cmpf oeq, %5, %29 : vector<8x2x128xf32>
    %31 = arith.extui %30 : vector<8x2x128xi1> to vector<8x2x128xi32>
    %32 = arith.sitofp %31 : vector<8x2x128xi32> to vector<8x2x128xf32>
    %cst_11 = arith.constant dense<0.000000e+00> : vector<2x128xf32>
    %33 = vector.multi_reduction <add>, %32, %cst_11 [0] : vector<8x2x128xf32> to vector<2x128xf32>
    %34 = vector.shape_cast %33 : vector<2x128xf32> to vector<1x2x128xf32>
    %cst_12 = arith.constant 1.000000e+01 : f32
    %35 = vector.broadcast %cst_12 : f32 to vector<1x2x128xf32>
    %36 = arith.subf %9, %35 : vector<1x2x128xf32>
    %cst_13 = arith.constant 0.000000e+00 : f32
    %37 = vector.broadcast %cst_13 : f32 to vector<1x2x128xf32>
    %38 = arith.maximumf %36, %37 : vector<1x2x128xf32>
    %39 = arith.mulf %38, %38 : vector<1x2x128xf32>
    %40 = arith.mulf %39, %34 : vector<1x2x128xf32>
    %41 = vector.broadcast %9 : vector<1x2x128xf32> to vector<8x2x128xf32>
    %42 = arith.subf %41, %5 : vector<8x2x128xf32>
    %cst_14 = arith.constant 1.000000e+01 : f32
    %43 = vector.broadcast %cst_14 : f32 to vector<8x2x128xf32>
    %44 = arith.subf %42, %43 : vector<8x2x128xf32>
    %cst_15 = arith.constant 0.000000e+00 : f32
    %45 = vector.broadcast %cst_15 : f32 to vector<8x2x128xf32>
    %46 = arith.maximumf %44, %45 : vector<8x2x128xf32>
    %47 = arith.mulf %46, %46 : vector<8x2x128xf32>
    %cst_16 = arith.constant dense<0.000000e+00> : vector<2x128xf32>
    %48 = vector.multi_reduction <add>, %47, %cst_16 [0] : vector<8x2x128xf32> to vector<2x128xf32>
    %49 = vector.shape_cast %48 : vector<2x128xf32> to vector<1x2x128xf32>
    %c0_17 = arith.constant 0 : index
    %c0_18 = arith.constant 0 : index
    %c0_19 = arith.constant 0 : index
    %50 = vector.load %arg4[%c0_17, %c0_18, %c0_19] : memref<1x1x1xf32, #tpu.memory_space<vmem>>, vector<1x1x1xf32>
    %51 = vector.shape_cast %28 : vector<1x2x128xf32> to vector<1x1x2x128xf32>
    %cst_20 = arith.constant dense<0.000000e+00> : vector<1xf32>
    %52 = vector.multi_reduction <add>, %51, %cst_20 [1, 2, 3] : vector<1x1x2x128xf32> to vector<1xf32>
    %53 = vector.shape_cast %52 : vector<1xf32> to vector<1x1x1x1xf32>
    %54 = vector.extract %53[0, 0, 0, 0] : f32 from vector<1x1x1x1xf32>
    %55 = vector.broadcast %54 : f32 to vector<1x1x1xf32>
    %56 = arith.addf %50, %55 : vector<1x1x1xf32>
    %c0_21 = arith.constant 0 : index
    %c0_22 = arith.constant 0 : index
    %c0_23 = arith.constant 0 : index
    %57 = vector.load %arg4[%c0_21, %c0_22, %c0_23] : memref<1x1x1xf32, #tpu.memory_space<vmem>>, vector<1x1x1xf32>
    tpu.vector_store %arg4[%c0_21, %c0_22, %c0_23], %56 {strides = array<i32>} : memref<1x1x1xf32, #tpu.memory_space<vmem>>, vector<1x1x1xf32>,
    %c0_24 = arith.constant 0 : index
    %c0_25 = arith.constant 0 : index
    %c0_26 = arith.constant 0 : index
    %58 = vector.load %arg5[%c0_24, %c0_25, %c0_26] : memref<1x1x1xf32, #tpu.memory_space<vmem>>, vector<1x1x1xf32>
    %59 = vector.shape_cast %26 : vector<1x2x128xf32> to vector<1x1x2x128xf32>
    %cst_27 = arith.constant dense<0.000000e+00> : vector<1xf32>
    %60 = vector.multi_reduction <add>, %59, %cst_27 [1, 2, 3] : vector<1x1x2x128xf32> to vector<1xf32>
    %61 = vector.shape_cast %60 : vector<1xf32> to vector<1x1x1x1xf32>
    %62 = vector.extract %61[0, 0, 0, 0] : f32 from vector<1x1x1x1xf32>
    %63 = vector.broadcast %62 : f32 to vector<1x1x1xf32>
    %64 = arith.addf %58, %63 : vector<1x1x1xf32>
    %c0_28 = arith.constant 0 : index
    %c0_29 = arith.constant 0 : index
    %c0_30 = arith.constant 0 : index
    %65 = vector.load %arg5[%c0_28, %c0_29, %c0_30] : memref<1x1x1xf32, #tpu.memory_space<vmem>>, vector<1x1x1xf32>
    tpu.vector_store %arg5[%c0_28, %c0_29, %c0_30], %64 {strides = array<i32>} : memref<1x1x1xf32, #tpu.memory_space<vmem>>, vector<1x1x1xf32>,
    %c0_31 = arith.constant 0 : index
    %c0_32 = arith.constant 0 : index
    %c0_33 = arith.constant 0 : index
    %66 = vector.load %arg6[%c0_31, %c0_32, %c0_33] : memref<1x1x1xf32, #tpu.memory_space<vmem>>, vector<1x1x1xf32>
    %67 = vector.shape_cast %40 : vector<1x2x128xf32> to vector<1x1x2x128xf32>
    %cst_34 = arith.constant dense<0.000000e+00> : vector<1xf32>
    %68 = vector.multi_reduction <add>, %67, %cst_34 [1, 2, 3] : vector<1x1x2x128xf32> to vector<1xf32>
    %69 = vector.shape_cast %68 : vector<1xf32> to vector<1x1x1x1xf32>
    %70 = vector.extract %69[0, 0, 0, 0] : f32 from vector<1x1x1x1xf32>
    %71 = vector.broadcast %70 : f32 to vector<1x1x1xf32>
    %72 = arith.addf %66, %71 : vector<1x1x1xf32>
    %c0_35 = arith.constant 0 : index
    %c0_36 = arith.constant 0 : index
    %c0_37 = arith.constant 0 : index
    %73 = vector.load %arg6[%c0_35, %c0_36, %c0_37] : memref<1x1x1xf32, #tpu.memory_space<vmem>>, vector<1x1x1xf32>
    tpu.vector_store %arg6[%c0_35, %c0_36, %c0_37], %72 {strides = array<i32>} : memref<1x1x1xf32, #tpu.memory_space<vmem>>, vector<1x1x1xf32>,
    %c0_38 = arith.constant 0 : index
    %c0_39 = arith.constant 0 : index
    %c0_40 = arith.constant 0 : index
    %74 = vector.load %arg7[%c0_38, %c0_39, %c0_40] : memref<1x1x1xf32, #tpu.memory_space<vmem>>, vector<1x1x1xf32>
    %75 = vector.shape_cast %49 : vector<1x2x128xf32> to vector<1x1x2x128xf32>
    %cst_41 = arith.constant dense<0.000000e+00> : vector<1xf32>
    %76 = vector.multi_reduction <add>, %75, %cst_41 [1, 2, 3] : vector<1x1x2x128xf32> to vector<1xf32>
    %77 = vector.shape_cast %76 : vector<1xf32> to vector<1x1x1x1xf32>
    %78 = vector.extract %77[0, 0, 0, 0] : f32 from vector<1x1x1x1xf32>
    %79 = vector.broadcast %78 : f32 to vector<1x1x1xf32>
    %80 = arith.addf %74, %79 : vector<1x1x1xf32>
    %c0_42 = arith.constant 0 : index
    %c0_43 = arith.constant 0 : index
    %c0_44 = arith.constant 0 : index
    %81 = vector.load %arg7[%c0_42, %c0_43, %c0_44] : memref<1x1x1xf32, #tpu.memory_space<vmem>>, vector<1x1x1xf32>
    tpu.vector_store %arg7[%c0_42, %c0_43, %c0_44], %80 {strides = array<i32>} : memref<1x1x1xf32, #tpu.memory_space<vmem>>, vector<1x1x1xf32>,
    return
  }
  func.func @transform_0(%arg0: i32, %arg1: i32) -> (i32, i32, i32, i32) {
    %c0_i32 = arith.constant 0 : i32
    %c0_i32_0 = arith.constant 0 : i32
    %c0_i32_1 = arith.constant 0 : i32
    return %arg0, %c0_i32, %arg1, %c0_i32_0 : i32, i32, i32, i32
  }
  func.func @transform_1(%arg0: i32, %arg1: i32) -> (i32, i32, i32, i32) {
    %c0_i32 = arith.constant 0 : i32
    %c0_i32_0 = arith.constant 0 : i32
    %c0_i32_1 = arith.constant 0 : i32
    return %arg0, %c0_i32, %arg1, %c0_i32_0 : i32, i32, i32, i32
  }
  func.func @transform_2(%arg0: i32, %arg1: i32) -> (i32, i32, i32) {
    %c0_i32 = arith.constant 0 : i32
    %c0_i32_0 = arith.constant 0 : i32
    %c0_i32_1 = arith.constant 0 : i32
    return %arg0, %c0_i32, %c0_i32_0 : i32, i32, i32
  }
  func.func @transform_3(%arg0: i32, %arg1: i32) -> (i32, i32, i32) {
    %c0_i32 = arith.constant 0 : i32
    %c0_i32_0 = arith.constant 0 : i32
    %c0_i32_1 = arith.constant 0 : i32
    return %arg0, %c0_i32, %c0_i32_0 : i32, i32, i32
  }
  func.func @transform_4(%arg0: i32, %arg1: i32) -> (i32, i32, i32) {
    %c0_i32 = arith.constant 0 : i32
    %c0_i32_0 = arith.constant 0 : i32
    %c0_i32_1 = arith.constant 0 : i32
    return %arg0, %c0_i32, %c0_i32_0 : i32, i32, i32
  }
  func.func @transform_5(%arg0: i32, %arg1: i32) -> (i32, i32, i32) {
    %c0_i32 = arith.constant 0 : i32
    %c0_i32_0 = arith.constant 0 : i32
    %c0_i32_1 = arith.constant 0 : i32
    return %arg0, %c0_i32, %c0_i32_0 : i32, i32, i32
  }
}

</mosaic_0001>

<llo_original>
// kernel: tpu_custom_call.1
$region0: #{tpu_custom_call.1}
  #allocation0 [shape = 'u32[]', space=smem, size = 0x4, offset = 0x4, fixed_abs, tag = 'smem constant byte address 0x4 - core index']
  #allocation1 [shape = 'u32[144,128]{1,0:T(1,128)}', space=vmem, size = 0x12000, scoped, tag = 'internal scratch']
  %s0 = inlined_call_operand.hbm [shape: f32[2,8,2,128], index: 0, kind: input, shape index: {}]
  %s1 = inlined_call_operand.hbm [shape: s32[2,1,2,128], index: 1, kind: input, shape index: {}]
  %s2 = inlined_call_operand.vmem [shape: f32[2,1,1], index: 2, kind: output, shape index: {0}]
  %s3 = inlined_call_operand.vmem [shape: f32[2,1,1], index: 3, kind: output, shape index: {1}]
  %s4 = inlined_call_operand.vmem [shape: f32[2,1,1], index: 4, kind: output, shape index: {2}]
  %s5 = inlined_call_operand.vmem [shape: f32[2,1,1], index: 5, kind: output, shape index: {3}]
  %6 = xla_tuple %s2, %s3, %s4, %s5
  %s7 = sld [smem:[#allocation0]]
  $region77: #{tpu_custom_call.1} parent=0
    _
  %s9 = ssub.s32 1, %s7
  %s10 = scalar_select 0, %s9, %s7
  $region1: #{tpu_custom_call.1} parent=0
    #allocation2 [shape = 'u8[16384]{0}', space=vmem, size = 0x4000, scoped, tag = 'input window, operand 0']
    #allocation3 [shape = 's32[2]{0}', space=sflag, size = 0x8, scoped, tag = 'scoped memory for tpu_custom_call.1']
    #allocation4 [shape = 'u8[2048]{0}', space=vmem, size = 0x800, scoped, tag = 'input window, operand 1']
    #allocation5 [shape = 's32[2]{0}', space=sflag, size = 0x8, scoped, tag = 'scoped memory for tpu_custom_call.1']
    %11 = vsyncpa [#allocation3], 0
    %s12 = scalar_lea.sflag [#allocation3], 1
    %13 = vsyncpa %s12, 0
    %14 = vsyncpa [#allocation5], 0
    %s15 = scalar_lea.sflag [#allocation5], 1
    %16 = vsyncpa %s15, 0
    loop: start=0, step=1, limit=4
    $region2: #{tpu_custom_call.1} parent=1 // loop_pre_header
      _
    $region3: #{tpu_custom_call.1} parent=1 // loop_header
      %s18 = sphi 0, %s22
      %p19 = scmp.ge.s32.totalorder %s18, 4
      %s25 = sphi 0, %s37
      %s26 = sphi 0, %s33
      %s27 = sphi 0, %s25
      %s28 = sphi 0, %s26
      %s29 = sphi 0, %s27
      %s30 = sphi 0, %s28
      %s42 = sphi 0, %s44
      %s45 = sphi 0, %s42
      %s46 = sphi 0, %s45
      %s62 = sphi 0, %s46
      %s70 = sphi 0, %s72
      %s73 = sphi 0, %s70
      %s74 = sphi 0, %s73
      %s90 = sphi 0, %s74
      %s96 = sphi 0, %s98
      %s99 = sphi 0, %s96
      %s100 = sphi 0, %s99
      %s116 = sphi 0, %s100
      %s122 = sphi 0, %s124
      %s125 = sphi 0, %s122
      %s126 = sphi 0, %s125
      %s142 = sphi 0, %s126
      %s148 = sphi 0, %s150
      %s151 = sphi 0, %s148
      %s152 = sphi 0, %s151
      %s168 = sphi 0, %s152
      %s174 = sphi 0, %s176
      %s177 = sphi 0, %s174
      %s178 = sphi 0, %s177
      %s194 = sphi 0, %s178
    $region4: #{tpu_custom_call.1} parent=1 // loop_header_branch
      %21 = sbr.rel (%p19) target = $region8
    $region5: #{tpu_custom_call.1} parent=1 // loop_body
      %s23 = ssub.s32 %s18, 1
      %s24 = ssub.s32 %s18, 2
      %s31 = sadd.s32 1, %s26
      %p32 = scmp.ge.s32.totalorder %s31, 1
      %s33 = scalar_select %p32, 0, %s31
      %s34 = sadd.s32 1, %s25
      %s35 = scalar_select %p32, %s34, %s25
      %p36 = scmp.ge.s32.totalorder %s35, 2
      %s37 = scalar_select %p36, 0, %s35
      %s38 = ssub.s32 %s25, %s37
      %s39 = ssub.s32 %s26, %s33
      %s40 = sor.u32 %s38, %s39
      %p41 = scmp.eq.s32.totalorder %s40, 0
      %s43 = sadd.s32 %s42, 1
      %s44 = scalar_select %p41, %s42, %s43
      %p47 = pneg %p41
      %p48 = scmp.eq.s32.totalorder %s18, 1
      %p49 = por %p47, %p48
      %p50 = scmp.ne.s32.totalorder %s42, %s45
      %p51 = scmp.eq.s32.totalorder %s18, 0
      %p52 = por %p50, %p51
      %p53 = scmp.ne.s32.totalorder %s42, %s45
      %p54 = scmp.eq.s32.totalorder %s23, 1
      %p55 = por %p53, %p54
      %p56 = scmp.ne.s32.totalorder %s45, %s46
      %p57 = scmp.eq.s32.totalorder %s23, 0
      %p58 = por %p56, %p57
      %p59 = scmp.ne.s32.totalorder %s45, %s46
      %p60 = scmp.eq.s32.totalorder %s24, 1
      %p61 = por %p59, %p60
      %p63 = scmp.ne.s32.totalorder %s46, %s62
      %p64 = scmp.eq.s32.totalorder %s24, 0
      %p65 = por %p63, %p64
      %s66 = ssub.s32 %s25, %s37
      %s67 = ssub.s32 %s26, %s33
      %s68 = sor.u32 %s66, %s67
      %p69 = scmp.eq.s32.totalorder %s68, 0
      %s71 = sadd.s32 %s70, 1
      %s72 = scalar_select %p69, %s70, %s71
      %p75 = pneg %p69
      %p76 = scmp.eq.s32.totalorder %s18, 1
      %p77 = por %p75, %p76
      %p78 = scmp.ne.s32.totalorder %s70, %s73
      %p79 = scmp.eq.s32.totalorder %s18, 0
      %p80 = por %p78, %p79
      %p81 = scmp.ne.s32.totalorder %s70, %s73
      %p82 = scmp.eq.s32.totalorder %s23, 1
      %p83 = por %p81, %p82
      %p84 = scmp.ne.s32.totalorder %s73, %s74
      %p85 = scmp.eq.s32.totalorder %s23, 0
      %p86 = por %p84, %p85
      %p87 = scmp.ne.s32.totalorder %s73, %s74
      %p88 = scmp.eq.s32.totalorder %s24, 1
      %p89 = por %p87, %p88
      %p91 = scmp.ne.s32.totalorder %s74, %s90
      %p92 = scmp.eq.s32.totalorder %s24, 0
      %p93 = por %p91, %p92
      %s94 = ssub.s32 %s25, %s37
      %p95 = scmp.eq.s32.totalorder %s94, 0
      %s97 = sadd.s32 %s96, 1
      %s98 = scalar_select %p95, %s96, %s97
      %p101 = pneg %p95
      %p102 = scmp.eq.s32.totalorder %s18, 1
      %p103 = por %p101, %p102
      %p104 = scmp.ne.s32.totalorder %s96, %s99
      %p105 = scmp.eq.s32.totalorder %s18, 0
      %p106 = por %p104, %p105
      %p107 = scmp.ne.s32.totalorder %s96, %s99
      %p108 = scmp.eq.s32.totalorder %s23, 1
      %p109 = por %p107, %p108
      %p110 = scmp.ne.s32.totalorder %s99, %s100
      %p111 = scmp.eq.s32.totalorder %s23, 0
      %p112 = por %p110, %p111
      %p113 = scmp.ne.s32.totalorder %s99, %s100
      %p114 = scmp.eq.s32.totalorder %s24, 1
      %p115 = por %p113, %p114
      %p117 = scmp.ne.s32.totalorder %s100, %s116
      %p118 = scmp.eq.s32.totalorder %s24, 0
      %p119 = por %p117, %p118
      %s120 = ssub.s32 %s25, %s37
      %p121 = scmp.eq.s32.totalorder %s120, 0
      %s123 = sadd.s32 %s122, 1
      %s124 = scalar_select %p121, %s122, %s123
      %p127 = pneg %p121
      %p128 = scmp.eq.s32.totalorder %s18, 1
      %p129 = por %p127, %p128
      %p130 = scmp.ne.s32.totalorder %s122, %s125
      %p131 = scmp.eq.s32.totalorder %s18, 0
      %p132 = por %p130, %p131
      %p133 = scmp.ne.s32.totalorder %s122, %s125
      %p134 = scmp.eq.s32.totalorder %s23, 1
      %p135 = por %p133, %p134
      %p136 = scmp.ne.s32.totalorder %s125, %s126
      %p137 = scmp.eq.s32.totalorder %s23, 0
      %p138 = por %p136, %p137
      %p139 = scmp.ne.s32.totalorder %s125, %s126
      %p140 = scmp.eq.s32.totalorder %s24, 1
      %p141 = por %p139, %p140
      %p143 = scmp.ne.s32.totalorder %s126, %s142
      %p144 = scmp.eq.s32.totalorder %s24, 0
      %p145 = por %p143, %p144
      %s146 = ssub.s32 %s25, %s37
      %p147 = scmp.eq.s32.totalorder %s146, 0
      %s149 = sadd.s32 %s148, 1
      %s150 = scalar_select %p147, %s148, %s149
      %p153 = pneg %p147
      %p154 = scmp.eq.s32.totalorder %s18, 1
      %p155 = por %p153, %p154
      %p156 = scmp.ne.s32.totalorder %s148, %s151
      %p157 = scmp.eq.s32.totalorder %s18, 0
      %p158 = por %p156, %p157
      %p159 = scmp.ne.s32.totalorder %s148, %s151
      %p160 = scmp.eq.s32.totalorder %s23, 1
      %p161 = por %p159, %p160
      %p162 = scmp.ne.s32.totalorder %s151, %s152
      %p163 = scmp.eq.s32.totalorder %s23, 0
      %p164 = por %p162, %p163
      %p165 = scmp.ne.s32.totalorder %s151, %s152
      %p166 = scmp.eq.s32.totalorder %s24, 1
      %p167 = por %p165, %p166
      %p169 = scmp.ne.s32.totalorder %s152, %s168
      %p170 = scmp.eq.s32.totalorder %s24, 0
      %p171 = por %p169, %p170
      %s172 = ssub.s32 %s25, %s37
      %p173 = scmp.eq.s32.totalorder %s172, 0
      %s175 = sadd.s32 %s174, 1
      %s176 = scalar_select %p173, %s174, %s175
      %p179 = pneg %p173
      %p180 = scmp.eq.s32.totalorder %s18, 1
      %p181 = por %p179, %p180
      %p182 = scmp.ne.s32.totalorder %s174, %s177
      %p183 = scmp.eq.s32.totalorder %s18, 0
      %p184 = por %p182, %p183
      %p185 = scmp.ne.s32.totalorder %s174, %s177
      %p186 = scmp.eq.s32.totalorder %s23, 1
      %p187 = por %p185, %p186
      %p188 = scmp.ne.s32.totalorder %s177, %s178
      %p189 = scmp.eq.s32.totalorder %s23, 0
      %p190 = por %p188, %p189
      %p191 = scmp.ne.s32.totalorder %s177, %s178
      %p192 = scmp.eq.s32.totalorder %s24, 1
      %p193 = por %p191, %p192
      %p195 = scmp.ne.s32.totalorder %s178, %s194
      %p196 = scmp.eq.s32.totalorder %s24, 0
      %p197 = por %p195, %p196
      %p198 = scmp.le.s32.totalorder 1, %s18
      %p199 = scmp.lt.s32.totalorder %s18, 3
      %p200 = pnand %p198, %p199
      %p201 = pneg %p200
      // Predicated region
      $region9: #{tpu_custom_call.1} parent=5 // pred_check
        _
      $region10: #{tpu_custom_call.1} parent=5 // pred_check_branch
        %203 = sbr.rel (%p200) target = $region12
      $region11: #{tpu_custom_call.1} parent=5 // pred_region
        %s204 = ssub.s32 %s18, 1
      $region12: #{tpu_custom_call.1} parent=5 // pred_fallthru
        _
      %p205 = scmp.lt.s32.totalorder %s18, 2
      // Predicated region
      $region13: #{tpu_custom_call.1} parent=5 // pred_check
        %p206 = pneg %p205
      $region14: #{tpu_custom_call.1} parent=5 // pred_check_branch
        %208 = sbr.rel (%p206) target = $region16
      $region15: #{tpu_custom_call.1} parent=5 // pred_region
        // Predicated region
        $region17: #{tpu_custom_call.1} parent=15 // pred_check
          %p209 = pneg %p52
        $region18: #{tpu_custom_call.1} parent=15 // pred_check_branch
          %211 = sbr.rel (%p209) target = $region20
        $region19: #{tpu_custom_call.1} parent=15 // pred_region
          %s212 = sand.u32 %s42, 1
          %s213 = scalar_lea.sflag [#allocation3], %s212
          %s214 = sand.u32 %s42, 1
          %s215 = smul.addr %s214, 16
          %s216 = scalar_lea.vmem [#allocation2], %s215
          %s218 = ssub.s32 256, 256
          %219 = vsyncadd %s213, %s218
          %s220 = smul.addr %s25, 8
          %s221 = sadd.s32 %s26, %s220
          %s222 = smul.addr %s221, 32
          %s223 = scalar_lea.hbm %s0, %s222
          %s224 = sshll.u32 %s216, 4
          %s225 = int_to_ptr.vmem [resolvable:$true] %s224
          %230 = dma.hbm_to_vmem [thread:$0]  %s223, 256, %s225, %s213, 32, 32, 2
        $region20: #{tpu_custom_call.1} parent=15 // pred_fallthru
          _
        // Predicated region
        $region21: #{tpu_custom_call.1} parent=15 // pred_check
          %p231 = pneg %p80
        $region22: #{tpu_custom_call.1} parent=15 // pred_check_branch
          %233 = sbr.rel (%p231) target = $region24
        $region23: #{tpu_custom_call.1} parent=15 // pred_region
          %s234 = sand.u32 %s70, 1
          %s235 = scalar_lea.sflag [#allocation5], %s234
          %s236 = sand.u32 %s70, 1
          %s237 = smul.addr %s236, 2
          %s238 = scalar_lea.vmem [#allocation4], %s237
          %s240 = ssub.s32 32, 32
          %241 = vsyncadd %s235, %s240
          %s242 = sadd.s32 %s26, %s25
          %s243 = smul.addr %s242, 32
          %s244 = scalar_lea.hbm %s1, %s243
          %s246 = sshll.u32 %s238, 4
          %s247 = int_to_ptr.vmem [resolvable:$true] %s246
          %249 = dma.hbm_to_vmem [thread:$0]  %s244, 32, %s247, %s235
        $region24: #{tpu_custom_call.1} parent=15 // pred_fallthru
          _
      $region16: #{tpu_custom_call.1} parent=5 // pred_fallthru
        _
      %p250 = scmp.le.s32.totalorder 1, %s18
      %p251 = scmp.lt.s32.totalorder %s18, 3
      %p252 = pnand %p250, %p251
      %p253 = pneg %p252
      // Predicated region
      $region25: #{tpu_custom_call.1} parent=5 // pred_check
        _
      $region26: #{tpu_custom_call.1} parent=5 // pred_check_branch
        %255 = sbr.rel (%p252) target = $region28
      $region27: #{tpu_custom_call.1} parent=5 // pred_region
        %s256 = ssub.s32 %s18, 1
        %s257 = sand.u32 %s45, 1
        %s258 = scalar_lea.sflag [#allocation3], %s257
        %s259 = sand.u32 %s45, 1
        %s260 = smul.addr %s259, 16
        %s261 = scalar_lea.vmem [#allocation2], %s260
        // Predicated region
        $region29: #{tpu_custom_call.1} parent=27 // pred_check
          %p262 = pneg %p58
        $region30: #{tpu_custom_call.1} parent=27 // pred_check_branch
          %264 = sbr.rel (%p262) target = $region32
        $region31: #{tpu_custom_call.1} parent=27 // pred_region
          %265 = dma.done %s258, 256
        $region32: #{tpu_custom_call.1} parent=27 // pred_fallthru
          _
        %s266 = sand.u32 %s73, 1
        %s267 = scalar_lea.sflag [#allocation5], %s266
        %s268 = sand.u32 %s73, 1
        %s269 = smul.addr %s268, 2
        %s270 = scalar_lea.vmem [#allocation4], %s269
        // Predicated region
        $region33: #{tpu_custom_call.1} parent=27 // pred_check
          %p271 = pneg %p86
        $region34: #{tpu_custom_call.1} parent=27 // pred_check_branch
          %273 = sbr.rel (%p271) target = $region36
        $region35: #{tpu_custom_call.1} parent=27 // pred_region
          %274 = dma.done %s267, 32
        $region36: #{tpu_custom_call.1} parent=27 // pred_fallthru
          _
        %s275 = sand.u32 %s45, 1
        %s276 = scalar_lea.sflag [#allocation3], %s275
        %s277 = sand.u32 %s45, 1
        %s278 = smul.addr %s277, 16
        %s279 = scalar_lea.vmem [#allocation2], %s278
        %p280 = pneg %p58
        %p281 = pneg %p55
        %s282 = sand.u32 %s73, 1
        %s283 = scalar_lea.sflag [#allocation5], %s282
        %s284 = sand.u32 %s73, 1
        %s285 = smul.addr %s284, 2
        %s286 = scalar_lea.vmem [#allocation4], %s285
        %p287 = pneg %p86
        %p288 = pneg %p83
        %p289 = pneg %p112
        %p290 = pneg %p109
        %p291 = scmp.lt.s32.totalorder %s27, 1
        %s292 = scalar_select %p291, %s27, 1
        %s293 = scalar_lea.vmem %s2, %s292
        %p294 = pneg %p138
        %p295 = pneg %p135
        %p296 = scmp.lt.s32.totalorder %s27, 1
        %s297 = scalar_select %p296, %s27, 1
        %s298 = scalar_lea.vmem %s3, %s297
        %p299 = pneg %p164
        %p300 = pneg %p161
        %p301 = scmp.lt.s32.totalorder %s27, 1
        %s302 = scalar_select %p301, %s27, 1
        %s303 = scalar_lea.vmem %s4, %s302
        %p304 = pneg %p190
        %p305 = pneg %p187
        %p306 = scmp.lt.s32.totalorder %s27, 1
        %s307 = scalar_select %p306, %s27, 1
        %s308 = scalar_lea.vmem %s5, %s307
        %p309 = scmp.lt.s32.totalorder %s27, 1
        %s310 = scalar_select %p309, %s27, 1
        %s311 = scalar_lea.vmem %s2, %s310
        %p312 = scmp.lt.s32.totalorder %s27, 1
        %s313 = scalar_select %p312, %s27, 1
        %s314 = scalar_lea.vmem %s3, %s313
        %p315 = scmp.lt.s32.totalorder %s27, 1
        %s316 = scalar_select %p315, %s27, 1
        %s317 = scalar_lea.vmem %s4, %s316
        %p318 = scmp.lt.s32.totalorder %s27, 1
        %s319 = scalar_select %p318, %s27, 1
        %s320 = scalar_lea.vmem %s5, %s319
        %p321 = scmp.eq.s32.totalorder %s28, 0
        // Predicated region
        $region37: #{tpu_custom_call.1} parent=27 // pred_check
          %p322 = pneg %p321
        $region38: #{tpu_custom_call.1} parent=27 // pred_check_branch
          %324 = sbr.rel (%p322) target = $region40
        $region39: #{tpu_custom_call.1} parent=27 // pred_region
          %vm325 = vcmask 0
          %326 = vst.msk [vmem:[%s311] sm:$0x1] %vm325, 0.0
          %327 = vst.msk [vmem:[%s314] sm:$0x1] %vm325, 0.0
          %328 = vst.msk [vmem:[%s317] sm:$0x1] %vm325, 0.0
          %329 = vst.msk [vmem:[%s320] sm:$0x1] %vm325, 0.0
        $region40: #{tpu_custom_call.1} parent=27 // pred_fallthru
          _
        %v330 = vld [vmem:[%s261] sm:$0x3]
        %v331 = vld [vmem:[%s261 + $0x2] sm:$0x3]
        %v332 = vld [vmem:[%s261 + $0x4] sm:$0x3]
        %v333 = vld [vmem:[%s261 + $0x6] sm:$0x3]
        %v334 = vld [vmem:[%s261 + $0x8] sm:$0x3]
        %v335 = vld [vmem:[%s261 + $0xa] sm:$0x3]
        %v336 = vld [vmem:[%s261 + $0xc] sm:$0x3]
        %v337 = vld [vmem:[%s261 + $0xe] sm:$0x3]
        %v338 = vld [vmem:[%s270] sm:$0x3]
        %vm339 = vcmask 1041408
        %v340 = vsel %vm339, %v330, -inf
        %v341 = vsel %vm339, %v331, -inf
        %v342 = vsel %vm339, %v332, -inf
        %v343 = vsel %vm339, %v333, -inf
        %v344 = vsel %vm339, %v334, -inf
        %v345 = vmax.f32 %v340, %v344
        %v346 = vsel %vm339, %v335, -inf
        %v347 = vmax.f32 %v341, %v346
        %v348 = vsel %vm339, %v336, -inf
        %v349 = vmax.f32 %v342, %v348
        %v350 = vsel %vm339, %v337, -inf
        %v351 = vmax.f32 %v343, %v350
        %v352 = vmax.f32 %v345, %v347
        %v353 = vmax.f32 %v349, %v351
        %v354 = vmax.f32 %v352, %v353
        %v355 = vsub.f32 %v330, %v354
        %v356 = vsub.f32 %v331, %v354
        %v357 = vsub.f32 %v332, %v354
        %v358 = vsub.f32 %v333, %v354
        %v359 = vsub.f32 %v334, %v354
        %v360 = vsub.f32 %v335, %v354
        %v361 = vsub.f32 %v336, %v354
        %v362 = vsub.f32 %v337, %v354
        %v363 = vmul.f32 %v355, 1.442695
        %v364 = vpow.pop %v363
        %v365 = vmul.f32 %v356, 1.442695
        %v366 = vpow.pop %v365
        %v367 = vmul.f32 %v357, 1.442695
        %v368 = vpow.pop %v367
        %v369 = vmul.f32 %v358, 1.442695
        %v370 = vpow.pop %v369
        %v371 = vmul.f32 %v359, 1.442695
        %v372 = vpow.pop %v371
        %v373 = vmul.f32 %v360, 1.442695
        %v374 = vpow.pop %v373
        %v375 = vmul.f32 %v361, 1.442695
        %v376 = vpow.pop %v375
        %v377 = vmul.f32 %v362, 1.442695
        %v378 = vpow.pop %v377
        %v379 = vsel %vm339, %v364, 0.0
        %v380 = vsel %vm339, %v366, 0.0
        %v381 = vadd.f32 %v379, %v380
        %v382 = vsel %vm339, %v368, 0.0
        %v383 = vadd.f32 %v381, %v382
        %v384 = vsel %vm339, %v370, 0.0
        %v385 = vadd.f32 %v383, %v384
        %v386 = vsel %vm339, %v372, 0.0
        %v387 = vadd.f32 %v385, %v386
        %v388 = vsel %vm339, %v374, 0.0
        %v389 = vadd.f32 %v387, %v388
        %v390 = vsel %vm339, %v376, 0.0
        %v391 = vadd.f32 %v389, %v390
        %v392 = vsel %vm339, %v378, 0.0
        %v393 = vadd.f32 %v391, %v392
        %v394 = vlog2.pop %v393
        %v395 = vmul.f32 %v394, 0.6931472
        %v396 = vadd.f32 %v395, %v354
        %vm397 = vcmp.eq.s32.totalorder %v338, 0
        %vm398 = vcmp.eq.s32.totalorder %v338, 1
        %vm399 = vcmp.eq.s32.totalorder %v338, 2
        %vm400 = vcmp.eq.s32.totalorder %v338, 3
        %vm401 = vcmp.eq.s32.totalorder %v338, 4
        %vm402 = vcmp.eq.s32.totalorder %v338, 5
        %vm403 = vcmp.eq.s32.totalorder %v338, 6
        %vm404 = vcmp.eq.s32.totalorder %v338, 7
        %v405 = vsel %vm397, %v330, 0.0
        %v406 = vsel %vm398, %v331, 0.0
        %v407 = vsel %vm399, %v332, 0.0
        %v408 = vsel %vm400, %v333, 0.0
        %v409 = vsel %vm401, %v334, 0.0
        %v410 = vsel %vm402, %v335, 0.0
        %v411 = vsel %vm403, %v336, 0.0
        %v412 = vsel %vm404, %v337, 0.0
        %v413 = vsel %vm339, %v405, 0.0
        %v414 = vsel %vm339, %v406, 0.0
        %v415 = vadd.f32 %v413, %v414
        %v416 = vsel %vm339, %v407, 0.0
        %v417 = vadd.f32 %v415, %v416
        %v418 = vsel %vm339, %v408, 0.0
        %v419 = vadd.f32 %v417, %v418
        %v420 = vsel %vm339, %v409, 0.0
        %v421 = vadd.f32 %v419, %v420
        %v422 = vsel %vm339, %v410, 0.0
        %v423 = vadd.f32 %v421, %v422
        %v424 = vsel %vm339, %v411, 0.0
        %v425 = vadd.f32 %v423, %v424
        %v426 = vsel %vm339, %v412, 0.0
        %v427 = vadd.f32 %v425, %v426
        %vm428 = vcmp.ne.s32.totalorder %v338, 4294967196
        %v429 = vsel %vm428, 1, 0
        %v430 = vcvt.s32.f32 %v429
        %v431 = vsub.f32 %v396, %v427
        %v432 = vmul.f32 %v431, %v430
        %vm433 = vcmp.eq.f32.partialorder %v330, %v354
        %vm434 = vcmp.eq.f32.partialorder %v331, %v354
        %vm435 = vcmp.eq.f32.partialorder %v332, %v354
        %vm436 = vcmp.eq.f32.partialorder %v333, %v354
        %vm437 = vcmp.eq.f32.partialorder %v334, %v354
        %vm438 = vcmp.eq.f32.partialorder %v335, %v354
        %vm439 = vcmp.eq.f32.partialorder %v336, %v354
        %vm440 = vcmp.eq.f32.partialorder %v337, %v354
        %v441 = vsel %vm433, 1, 0
        %v442 = vsel %vm434, 1, 0
        %v443 = vsel %vm435, 1, 0
        %v444 = vsel %vm436, 1, 0
        %v445 = vsel %vm437, 1, 0
        %v446 = vsel %vm438, 1, 0
        %v447 = vsel %vm439, 1, 0
        %v448 = vsel %vm440, 1, 0
        %v449 = vcvt.s32.f32 %v441
        %v450 = vcvt.s32.f32 %v442
        %v451 = vcvt.s32.f32 %v443
        %v452 = vcvt.s32.f32 %v444
        %v453 = vcvt.s32.f32 %v445
        %v454 = vcvt.s32.f32 %v446
        %v455 = vcvt.s32.f32 %v447
        %v456 = vcvt.s32.f32 %v448
        %v457 = vsel %vm339, %v449, 0.0
        %v458 = vsel %vm339, %v450, 0.0
        %v459 = vadd.f32 %v457, %v458
        %v460 = vsel %vm339, %v451, 0.0
        %v461 = vadd.f32 %v459, %v460
        %v462 = vsel %vm339, %v452, 0.0
        %v463 = vadd.f32 %v461, %v462
        %v464 = vsel %vm339, %v453, 0.0
        %v465 = vadd.f32 %v463, %v464
        %v466 = vsel %vm339, %v454, 0.0
        %v467 = vadd.f32 %v465, %v466
        %v468 = vsel %vm339, %v455, 0.0
        %v469 = vadd.f32 %v467, %v468
        %v470 = vsel %vm339, %v456, 0.0
        %v471 = vadd.f32 %v469, %v470
        %v472 = vsub.f32 %v354, 10.0
        %v473 = vmax.f32 %v472, 0.0
        %v474 = vmul.f32 %v473, %v473
        %v475 = vmul.f32 %v474, %v471
        %v476 = vsub.f32 %v354, %v330
        %v477 = vsub.f32 %v354, %v331
        %v478 = vsub.f32 %v354, %v332
        %v479 = vsub.f32 %v354, %v333
        %v480 = vsub.f32 %v354, %v334
        %v481 = vsub.f32 %v354, %v335
        %v482 = vsub.f32 %v354, %v336
        %v483 = vsub.f32 %v354, %v337
        %v484 = vsub.f32 %v476, 10.0
        %v485 = vsub.f32 %v477, 10.0
        %v486 = vsub.f32 %v478, 10.0
        %v487 = vsub.f32 %v479, 10.0
        %v488 = vsub.f32 %v480, 10.0
        %v489 = vsub.f32 %v481, 10.0
        %v490 = vsub.f32 %v482, 10.0
        %v491 = vsub.f32 %v483, 10.0
        %v492 = vmax.f32 %v484, 0.0
        %v493 = vmax.f32 %v485, 0.0
        %v494 = vmax.f32 %v486, 0.0
        %v495 = vmax.f32 %v487, 0.0
        %v496 = vmax.f32 %v488, 0.0
        %v497 = vmax.f32 %v489, 0.0
        %v498 = vmax.f32 %v490, 0.0
        %v499 = vmax.f32 %v491, 0.0
        %v500 = vmul.f32 %v492, %v492
        %v501 = vmul.f32 %v493, %v493
        %v502 = vmul.f32 %v494, %v494
        %v503 = vmul.f32 %v495, %v495
        %v504 = vmul.f32 %v496, %v496
        %v505 = vmul.f32 %v497, %v497
        %v506 = vmul.f32 %v498, %v498
        %v507 = vmul.f32 %v499, %v499
        %v508 = vsel %vm339, %v500, 0.0
        %v509 = vsel %vm339, %v501, 0.0
        %v510 = vadd.f32 %v508, %v509
        %v511 = vsel %vm339, %v502, 0.0
        %v512 = vadd.f32 %v510, %v511
        %v513 = vsel %vm339, %v503, 0.0
        %v514 = vadd.f32 %v512, %v513
        %v515 = vsel %vm339, %v504, 0.0
        %v516 = vadd.f32 %v514, %v515
        %v517 = vsel %vm339, %v505, 0.0
        %v518 = vadd.f32 %v516, %v517
        %v519 = vsel %vm339, %v506, 0.0
        %v520 = vadd.f32 %v518, %v519
        %v521 = vsel %vm339, %v507, 0.0
        %v522 = vadd.f32 %v520, %v521
        %v523 = vld [vmem:[%s311] sm:$0x1]
        %v524 = vsel %vm339, %v432, 0.0
        %525 = vadd.xlane.f32.xlu0 %v524
        %v526 = vpop.xlane.xlu0 %525
        %v527 = vrot.slane %v526, 4
        %v528 = vadd.f32 %v526, %v527
        %v529 = vrot.slane %v528, 2
        %v530 = vadd.f32 %v528, %v529
        %v531 = vrot.slane %v530, 1
        %v532 = vadd.f32 %v530, %v531
        %s533 = vtos %v532
        %v534 = vstv %s533
        %v535 = vadd.f32 %v523, %v534
        %vm536 = vcmask 0
        %537 = vst.msk [vmem:[%s311] sm:$0x1] %vm536, %v535
        %v538 = vld [vmem:[%s314] sm:$0x1]
        %v539 = vsel %vm339, %v430, 0.0
        %540 = vadd.xlane.f32.xlu0 %v539
        %v541 = vpop.xlane.xlu0 %540
        %v542 = vrot.slane %v541, 4
        %v543 = vadd.f32 %v541, %v542
        %v544 = vrot.slane %v543, 2
        %v545 = vadd.f32 %v543, %v544
        %v546 = vrot.slane %v545, 1
        %v547 = vadd.f32 %v545, %v546
        %s548 = vtos %v547
        %v549 = vstv %s548
        %v550 = vadd.f32 %v538, %v549
        %551 = vst.msk [vmem:[%s314] sm:$0x1] %vm536, %v550
        %v552 = vld [vmem:[%s317] sm:$0x1]
        %v553 = vsel %vm339, %v475, 0.0
        %554 = vadd.xlane.f32.xlu0 %v553
        %v555 = vpop.xlane.xlu0 %554
        %v556 = vrot.slane %v555, 4
        %v557 = vadd.f32 %v555, %v556
        %v558 = vrot.slane %v557, 2
        %v559 = vadd.f32 %v557, %v558
        %v560 = vrot.slane %v559, 1
        %v561 = vadd.f32 %v559, %v560
        %s562 = vtos %v561
        %v563 = vstv %s562
        %v564 = vadd.f32 %v552, %v563
        %565 = vst.msk [vmem:[%s317] sm:$0x1] %vm536, %v564
        %v566 = vld [vmem:[%s320] sm:$0x1]
        %v567 = vsel %vm339, %v522, 0.0
        %568 = vadd.xlane.f32.xlu0 %v567
        %v569 = vpop.xlane.xlu0 %568
        %v570 = vrot.slane %v569, 4
        %v571 = vadd.f32 %v569, %v570
        %v572 = vrot.slane %v571, 2
        %v573 = vadd.f32 %v571, %v572
        %v574 = vrot.slane %v573, 1
        %v575 = vadd.f32 %v573, %v574
        %s576 = vtos %v575
        %v577 = vstv %s576
        %v578 = vadd.f32 %v566, %v577
        %579 = vst.msk [vmem:[%s320] sm:$0x1] %vm536, %v578
        %p580 = scmp.lt.s32.totalorder %s27, 1
        %s581 = scalar_select %p580, %s27, 1
        %s582 = scalar_lea.vmem %s2, %s581
        %p583 = scmp.lt.s32.totalorder %s27, 1
        %s584 = scalar_select %p583, %s27, 1
        %s585 = scalar_lea.vmem %s3, %s584
        %p586 = scmp.lt.s32.totalorder %s27, 1
        %s587 = scalar_select %p586, %s27, 1
        %s588 = scalar_lea.vmem %s4, %s587
        %p589 = scmp.lt.s32.totalorder %s27, 1
        %s590 = scalar_select %p589, %s27, 1
        %s591 = scalar_lea.vmem %s5, %s590
        // Predicated region
        $region41: #{tpu_custom_call.1} parent=27 // pred_check
          %p592 = pneg %p109
        $region42: #{tpu_custom_call.1} parent=27 // pred_check_branch
          %594 = sbr.rel (%p592) target = $region44
        $region43: #{tpu_custom_call.1} parent=27 // pred_region
          _
        $region44: #{tpu_custom_call.1} parent=27 // pred_fallthru
          _
        // Predicated region
        $region45: #{tpu_custom_call.1} parent=27 // pred_check
          %p595 = pneg %p135
        $region46: #{tpu_custom_call.1} parent=27 // pred_check_branch
          %597 = sbr.rel (%p595) target = $region48
        $region47: #{tpu_custom_call.1} parent=27 // pred_region
          _
        $region48: #{tpu_custom_call.1} parent=27 // pred_fallthru
          _
        // Predicated region
        $region49: #{tpu_custom_call.1} parent=27 // pred_check
          %p598 = pneg %p161
        $region50: #{tpu_custom_call.1} parent=27 // pred_check_branch
          %600 = sbr.rel (%p598) target = $region52
        $region51: #{tpu_custom_call.1} parent=27 // pred_region
          _
        $region52: #{tpu_custom_call.1} parent=27 // pred_fallthru
          _
        // Predicated region
        $region53: #{tpu_custom_call.1} parent=27 // pred_check
          %p601 = pneg %p187
        $region54: #{tpu_custom_call.1} parent=27 // pred_check_branch
          %603 = sbr.rel (%p601) target = $region56
        $region55: #{tpu_custom_call.1} parent=27 // pred_region
          _
        $region56: #{tpu_custom_call.1} parent=27 // pred_fallthru
          _
      $region28: #{tpu_custom_call.1} parent=5 // pred_fallthru
        _
      %p604 = scmp.le.s32.totalorder 2, %s18
      // Predicated region
      $region57: #{tpu_custom_call.1} parent=5 // pred_check
        %p605 = pneg %p604
      $region58: #{tpu_custom_call.1} parent=5 // pred_check_branch
        %607 = sbr.rel (%p605) target = $region60
      $region59: #{tpu_custom_call.1} parent=5 // pred_region
        %s608 = ssub.s32 %s18, 2
        // Predicated region
        $region61: #{tpu_custom_call.1} parent=59 // pred_check
          %p609 = pneg %p115
        $region62: #{tpu_custom_call.1} parent=59 // pred_check_branch
          %611 = sbr.rel (%p609) target = $region64
        $region63: #{tpu_custom_call.1} parent=59 // pred_region
          %p612 = scmp.lt.s32.totalorder %s29, 1
          %s613 = scalar_select %p612, %s29, 1
          %s614 = scalar_lea.vmem %s2, %s613
        $region64: #{tpu_custom_call.1} parent=59 // pred_fallthru
          _
        // Predicated region
        $region65: #{tpu_custom_call.1} parent=59 // pred_check
          %p615 = pneg %p141
        $region66: #{tpu_custom_call.1} parent=59 // pred_check_branch
          %617 = sbr.rel (%p615) target = $region68
        $region67: #{tpu_custom_call.1} parent=59 // pred_region
          %p618 = scmp.lt.s32.totalorder %s29, 1
          %s619 = scalar_select %p618, %s29, 1
          %s620 = scalar_lea.vmem %s3, %s619
        $region68: #{tpu_custom_call.1} parent=59 // pred_fallthru
          _
        // Predicated region
        $region69: #{tpu_custom_call.1} parent=59 // pred_check
          %p621 = pneg %p167
        $region70: #{tpu_custom_call.1} parent=59 // pred_check_branch
          %623 = sbr.rel (%p621) target = $region72
        $region71: #{tpu_custom_call.1} parent=59 // pred_region
          %p624 = scmp.lt.s32.totalorder %s29, 1
          %s625 = scalar_select %p624, %s29, 1
          %s626 = scalar_lea.vmem %s4, %s625
        $region72: #{tpu_custom_call.1} parent=59 // pred_fallthru
          _
        // Predicated region
        $region73: #{tpu_custom_call.1} parent=59 // pred_check
          %p627 = pneg %p193
        $region74: #{tpu_custom_call.1} parent=59 // pred_check_branch
          %629 = sbr.rel (%p627) target = $region76
        $region75: #{tpu_custom_call.1} parent=59 // pred_region
          %p630 = scmp.lt.s32.totalorder %s29, 1
          %s631 = scalar_select %p630, %s29, 1
          %s632 = scalar_lea.vmem %s5, %s631
        $region76: #{tpu_custom_call.1} parent=59 // pred_fallthru
          _
      $region60: #{tpu_custom_call.1} parent=5 // pred_fallthru
        _
    $region6: #{tpu_custom_call.1} parent=1 // loop_footer
      %s22 = sadd.s32 1, %s18
    $region7: #{tpu_custom_call.1} parent=1 // loop_footer_branch
      %17 = sbr.rel target = $region3
    $region8: #{tpu_custom_call.1} parent=1 // loop_exit
      _
    %633 = vsyncpa [#allocation3], 1
    %s634 = scalar_lea.sflag [#allocation3], 1
    %635 = vsyncpa %s634, 1
    %636 = vsyncpa [#allocation5], 1
    %s637 = scalar_lea.sflag [#allocation5], 1
    %638 = vsyncpa %s637, 1

</llo_original>
